<compile_context>
chip_gen: v7x
topology: tpu7x:2x2x1
jax: 0.10.0
libtpu: 0.0.40
codegen_flags: <defaults>
</compile_context>

<pallas_src>
import math

import jax
import jax.numpy as jnp
from jax.experimental import pallas as pl
from jax.experimental.pallas import tpu as pltpu


# ----------------------------------------------------------------------------
# Fused kernel: all timesteps x all LSTM layers + final linear + ReLU
# ----------------------------------------------------------------------------
def _make_kernel(num_layers, hidden_size):
    L, H = num_layers, hidden_size

    def kernel(*refs):
        # inputs: x_t, h0, c0, [W_l, b_l]*L, lin_w, lin_b
        # outputs: out, h_n, c_n
        # scratch: h_carry, c_carry
        x_ref, h0_ref, c0_ref = refs[0:3]
        layer_refs = refs[3:3 + 2 * L]
        lin_w_ref = refs[3 + 2 * L]
        lin_b_ref = refs[4 + 2 * L]
        out_ref, h_out_ref, c_out_ref = refs[5 + 2 * L:8 + 2 * L]
        h_carry, c_carry = refs[8 + 2 * L:10 + 2 * L]

        t = pl.program_id(0)

        # Initialize the VMEM-resident (h, c) carry from the encoder state.
        @pl.when(t == 0)
        def _():
            h_carry[...] = h0_ref[...]
            c_carry[...] = c0_ref[...]

        x = x_ref[0]                              # (B, D_in) f32, this step
        for layer in range(L):                    # static unroll (small L)
            w_ref = layer_refs[2 * layer]         # (D_in_l + H, 4H) bf16
            b_ref = layer_refs[2 * layer + 1]     # (1, 4H)        f32
            h = h_carry[layer]                    # (B, H) f32
            c = c_carry[layer]                    # (B, H) f32

            # Single fused matmul per layer: K = D_in_l + H, N = 4H = 128.
            xh = jnp.concatenate([x, h], axis=-1).astype(jnp.bfloat16)
            gates = (jnp.dot(xh, w_ref[...],
                             preferred_element_type=jnp.float32)
                     + b_ref[...])                # (B, 4H) f32

            # Full 128-lane EUP passes, then static gate slices (i, f, g, o).
            sig = jax.nn.sigmoid(gates)
            tnh = jnp.tanh(gates)
            i_g = sig[:, 0 * H:1 * H]
            f_g = sig[:, 1 * H:2 * H]
            g_g = tnh[:, 2 * H:3 * H]
            o_g = sig[:, 3 * H:4 * H]

            c_new = f_g * c + i_g * g_g           # f32 state math
            h_new = o_g * jnp.tanh(c_new)

            h_carry[layer] = h_new
            c_carry[layer] = c_new
            x = h_new                             # input to next layer

        # Finalize on the last timestep only: linear + ReLU on the top-layer
        # hidden state, and write back the final (h, c).
        @pl.when(t == pl.num_programs(0) - 1)
        def _():
            y = (jnp.dot(x.astype(jnp.bfloat16), lin_w_ref[...],
                         preferred_element_type=jnp.float32)
                 + lin_b_ref[...])
            out_ref[...] = jnp.maximum(y, 0.0)
            h_out_ref[...] = h_carry[...]
            c_out_ref[...] = c_carry[...]

    return kernel


# ----------------------------------------------------------------------------
# Wrapper
# ----------------------------------------------------------------------------
def lstm_decoder_forward(X, enc_h, enc_c, params):
    """Pallas equivalent of LSTMDecoder.forward.

    X is (B, D_in) (single decode step, as in the PyTorch docstring) or
    (B, T, D_in) batch_first.  Returns (out, (h_n, c_n)) with
    out: (B, D_in),  h_n/c_n: (num_layers, B, H).
    """
    if X.ndim == 2:
        X = X[:, None, :]
    B, T, D_in = X.shape
    L, _, H = enc_h.shape
    D_out = params["lin_w"].shape[1]

    # Time-major so the per-step block is (1, B, D_in) with full last-2 dims.
    X_t = jnp.transpose(X, (1, 0, 2))

    flat_weights = []
    for (w, b) in params["lstm"]:
        flat_weights += [w, b]
    in_arrays = [X_t, enc_h, enc_c] + flat_weights + [params["lin_w"],
                                                      params["lin_b"]]

    def const_spec(shape):
        # Constant index_map: block fetched once, stays VMEM-resident.
        return pl.BlockSpec(shape, lambda t, _n=len(shape): (0,) * _n)

    in_specs = ([pl.BlockSpec((1, B, D_in), lambda t: (t, 0, 0))]
                + [const_spec(a.shape) for a in in_arrays[1:]])

    out_shape = (
        jax.ShapeDtypeStruct((B, D_out), jnp.float32),
        jax.ShapeDtypeStruct((L, B, H), jnp.float32),
        jax.ShapeDtypeStruct((L, B, H), jnp.float32),
    )
    out_specs = (const_spec((B, D_out)),
                 const_spec((L, B, H)),
                 const_spec((L, B, H)))

    out, h_n, c_n = pl.pallas_call(
        _make_kernel(L, H),
        out_shape=out_shape,
        grid_spec=pltpu.PrefetchScalarGridSpec(
            num_scalar_prefetch=0,
            grid=(T,),
            in_specs=in_specs,
            out_specs=out_specs,
            scratch_shapes=[pltpu.VMEM((L, B, H), jnp.float32),   # h carry
                            pltpu.VMEM((L, B, H), jnp.float32)],  # c carry
        ),
        compiler_params=pltpu.CompilerParams(
            dimension_semantics=("arbitrary",),      # sequential time axis
            vmem_limit_bytes=32 * 1024 * 1024,       # safe on v7x's 64 MiB
        ),
    )(*in_arrays)
    return out, (h_n, c_n)


# ----------------------------------------------------------------------------
# Deterministic parameter init (PyTorch nn.LSTM / nn.Linear shapes & ranges).
# Per layer the weights are pre-transposed, gate-concatenated (i, f, g, o) and
# stacked:  W = [W_ih; W_hh]  of shape (D_in_l + H, 4H) in bf16,
#           b = b_ih + b_hh   of shape (1, 4H)          in f32.
# ----------------------------------------------------------------------------
def init_params(key, input_size, hidden_size, num_layers):
    k = 1.0 / math.sqrt(hidden_size)
    params = {"lstm": []}
    for layer in range(num_layers):
        d_in = input_size if layer == 0 else hidden_size
        key, k1, k2, k3, k4 = jax.random.split(key, 5)
        w_ih = jax.random.uniform(k1, (d_in, 4 * hidden_size),
                                  jnp.float32, -k, k)
        w_hh = jax.random.uniform(k2, (hidden_size, 4 * hidden_size),
                                  jnp.float32, -k, k)
        b_ih = jax.random.uniform(k3, (1, 4 * hidden_size),
                                  jnp.float32, -k, k)
        b_hh = jax.random.uniform(k4, (1, 4 * hidden_size),
                                  jnp.float32, -k, k)
        w = jnp.concatenate([w_ih, w_hh], axis=0).astype(jnp.bfloat16)
        params["lstm"].append((w, b_ih + b_hh))
    key, k5, k6 = jax.random.split(key, 3)
    params["lin_w"] = jax.random.uniform(
        k5, (hidden_size, input_size), jnp.float32, -k, k).astype(jnp.bfloat16)
    params["lin_b"] = jax.random.uniform(
        k6, (1, input_size), jnp.float32, -k, k)
    return params


# ----------------------------------------------------------------------------
# Pure-JAX reference (same bf16-operand / f32-accumulate numerics)
# ----------------------------------------------------------------------------
def reference_forward(X, enc_h, enc_c, params):
    if X.ndim == 2:
        X = X[:, None, :]
    L, B, H = enc_h.shape
    T = X.shape[1]
    h = [enc_h[l] for l in range(L)]
    c = [enc_c[l] for l in range(L)]
    x = X[:, 0, :]
    for t in range(T):
        x = X[:, t, :]
        for layer, (w, b) in enumerate(params["lstm"]):
            xh = jnp.concatenate([x, h[layer]], axis=-1).astype(jnp.bfloat16)
            gates = jnp.dot(xh, w, preferred_element_type=jnp.float32) + b
            i = jax.nn.sigmoid(gates[:, 0 * H:1 * H])
            f = jax.nn.sigmoid(gates[:, 1 * H:2 * H])
            g = jnp.tanh(gates[:, 2 * H:3 * H])
            o = jax.nn.sigmoid(gates[:, 3 * H:4 * H])
            c_new = f * c[layer] + i * g
            h_new = o * jnp.tanh(c_new)
            h[layer] = h_new
            c[layer] = c_new
            x = h_new
    y = (jnp.dot(x.astype(jnp.bfloat16), params["lin_w"],
                 preferred_element_type=jnp.float32) + params["lin_b"])
    out = jnp.maximum(y, 0.0)
    return out, (jnp.stack(h, axis=0), jnp.stack(c, axis=0))


if __name__ == "__main__":
    batch = 2
    input_size = 16
    hidden_size = 32
    num_layers = 2
    seq_len = 8

    key = jax.random.PRNGKey(0)
    key, kx, kh, kc, kp = jax.random.split(key, 5)

    X = jax.random.normal(kx, (batch, seq_len, input_size), jnp.float32)
    enc_h = jax.random.normal(kh, (num_layers, batch, hidden_size), jnp.float32)
    enc_c = jax.random.normal(kc, (num_layers, batch, hidden_size), jnp.float32)
    params = init_params(kp, input_size, hidden_size, num_layers)

    fwd = jax.jit(lstm_decoder_forward)

    # --- multi-step (time grid) path -------------------------------------
    ref_out, (ref_h, ref_c) = reference_forward(X, enc_h, enc_c, params)
    out, (h_n, c_n) = fwd(X, enc_h, enc_c, params)
    out = jax.block_until_ready(out)
    h_n = jax.block_until_ready(h_n)
    c_n = jax.block_until_ready(c_n)

    assert out.shape == (batch, input_size)
    assert h_n.shape == (num_layers, batch, hidden_size)
    assert c_n.shape == (num_layers, batch, hidden_size)
    assert jnp.allclose(out, ref_out, atol=2e-3, rtol=2e-3)
    assert jnp.allclose(h_n, ref_h, atol=2e-3, rtol=2e-3)
    assert jnp.allclose(c_n, ref_c, atol=2e-3, rtol=2e-3)

    # --- single-step 2-D X path (the documented decoder call) ------------
    X2 = X[:, 0, :]
    ref2_out, (ref2_h, ref2_c) = reference_forward(X2, enc_h, enc_c, params)
    out2, (h2, c2) = fwd(X2, enc_h, enc_c, params)
    out2 = jax.block_until_ready(out2)
    assert jnp.allclose(out2, ref2_out, atol=2e-3, rtol=2e-3)
    assert jnp.allclose(h2, ref2_h, atol=2e-3, rtol=2e-3)
    assert jnp.allclose(c2, ref2_c, atol=2e-3, rtol=2e-3)

    print("KERNEL_OK")
</pallas_src>

<mosaic_0001>
module attributes {stable_mosaic.version = 11 : i64} {
  func.func @kernel(%arg0: i32, %arg1: memref<1x2x16xf32, #tpu.memory_space<vmem>>, %arg2: memref<2x2x32xf32, #tpu.memory_space<vmem>>, %arg3: memref<2x2x32xf32, #tpu.memory_space<vmem>>, %arg4: memref<48x128xbf16, #tpu.memory_space<vmem>>, %arg5: memref<1x128xf32, #tpu.memory_space<vmem>>, %arg6: memref<64x128xbf16, #tpu.memory_space<vmem>>, %arg7: memref<1x128xf32, #tpu.memory_space<vmem>>, %arg8: memref<32x16xbf16, #tpu.memory_space<vmem>>, %arg9: memref<1x16xf32, #tpu.memory_space<vmem>>, %arg10: memref<2x16xf32, #tpu.memory_space<vmem>>, %arg11: memref<2x2x32xf32, #tpu.memory_space<vmem>>, %arg12: memref<2x2x32xf32, #tpu.memory_space<vmem>>, %arg13: memref<2x2x32xf32, #tpu.memory_space<vmem>>, %arg14: memref<2x2x32xf32, #tpu.memory_space<vmem>>) attributes {dimension_semantics = [#tpu.dimension_semantics<arbitrary>], iteration_bounds = array<i64: 8>, scalar_prefetch = 0 : i64, scratch_operands = 2 : i64, tpu.core_type = #tpu.core_type<tc>, window_params = [{transform_indices = @transform_0, window_bounds = array<i64: 1, 2, 16>}, {pipeline_mode = #tpu.pipeline_mode<synchronous>, transform_indices = @transform_1, window_bounds = array<i64: 2, 2, 32>}, {pipeline_mode = #tpu.pipeline_mode<synchronous>, transform_indices = @transform_2, window_bounds = array<i64: 2, 2, 32>}, {pipeline_mode = #tpu.pipeline_mode<synchronous>, transform_indices = @transform_3, window_bounds = array<i64: 48, 128>}, {pipeline_mode = #tpu.pipeline_mode<synchronous>, transform_indices = @transform_4, window_bounds = array<i64: 1, 128>}, {pipeline_mode = #tpu.pipeline_mode<synchronous>, transform_indices = @transform_5, window_bounds = array<i64: 64, 128>}, {pipeline_mode = #tpu.pipeline_mode<synchronous>, transform_indices = @transform_6, window_bounds = array<i64: 1, 128>}, {pipeline_mode = #tpu.pipeline_mode<synchronous>, transform_indices = @transform_7, window_bounds = array<i64: 32, 16>}, {pipeline_mode = #tpu.pipeline_mode<synchronous>, transform_indices = @transform_8, window_bounds = array<i64: 1, 16>}, {pipeline_mode = #tpu.pipeline_mode<synchronous>, transform_indices = @transform_9, window_bounds = array<i64: 2, 16>}, {pipeline_mode = #tpu.pipeline_mode<synchronous>, transform_indices = @transform_10, window_bounds = array<i64: 2, 2, 32>}, {pipeline_mode = #tpu.pipeline_mode<synchronous>, transform_indices = @transform_11, window_bounds = array<i64: 2, 2, 32>}]} {
    %c0_i32 = arith.constant 0 : i32
    %0 = arith.cmpi eq, %arg0, %c0_i32 : i32
    %1 = arith.extui %0 : i1 to i32
    %c0_i32_0 = arith.constant 0 : i32
    %2 = arith.cmpi ne, %1, %c0_i32_0 : i32
    scf.if %2 {
      %c0_38 = arith.constant 0 : index
      %c0_39 = arith.constant 0 : index
      %c0_40 = arith.constant 0 : index
      %72 = vector.load %arg2[%c0_38, %c0_39, %c0_40] : memref<2x2x32xf32, #tpu.memory_space<vmem>>, vector<2x2x32xf32>
      %c0_41 = arith.constant 0 : index
      %c0_42 = arith.constant 0 : index
      %c0_43 = arith.constant 0 : index
      %73 = vector.load %arg13[%c0_41, %c0_42, %c0_43] : memref<2x2x32xf32, #tpu.memory_space<vmem>>, vector<2x2x32xf32>
      tpu.vector_store %arg13[%c0_41, %c0_42, %c0_43], %72 {strides = array<i32>} : memref<2x2x32xf32, #tpu.memory_space<vmem>>, vector<2x2x32xf32>,
      %c0_44 = arith.constant 0 : index
      %c0_45 = arith.constant 0 : index
      %c0_46 = arith.constant 0 : index
      %74 = vector.load %arg3[%c0_44, %c0_45, %c0_46] : memref<2x2x32xf32, #tpu.memory_space<vmem>>, vector<2x2x32xf32>
      %c0_47 = arith.constant 0 : index
      %c0_48 = arith.constant 0 : index
      %c0_49 = arith.constant 0 : index
      %75 = vector.load %arg14[%c0_47, %c0_48, %c0_49] : memref<2x2x32xf32, #tpu.memory_space<vmem>>, vector<2x2x32xf32>
      tpu.vector_store %arg14[%c0_47, %c0_48, %c0_49], %74 {strides = array<i32>} : memref<2x2x32xf32, #tpu.memory_space<vmem>>, vector<2x2x32xf32>,
    } else {
    }
    %c0 = arith.constant 0 : index
    %c0_1 = arith.constant 0 : index
    %c0_2 = arith.constant 0 : index
    %3 = vector.load %arg1[%c0, %c0_1, %c0_2] : memref<1x2x16xf32, #tpu.memory_space<vmem>>, vector<1x2x16xf32>
    %4 = vector.shape_cast %3 : vector<1x2x16xf32> to vector<2x16xf32>
    %c0_3 = arith.constant 0 : index
    %c0_4 = arith.constant 0 : index
    %c0_5 = arith.constant 0 : index
    %5 = vector.load %arg13[%c0_3, %c0_4, %c0_5] : memref<2x2x32xf32, #tpu.memory_space<vmem>>, vector<1x2x32xf32>
    %6 = vector.shape_cast %5 : vector<1x2x32xf32> to vector<2x32xf32>
    %c0_6 = arith.constant 0 : index
    %c0_7 = arith.constant 0 : index
    %c0_8 = arith.constant 0 : index
    %7 = vector.load %arg14[%c0_6, %c0_7, %c0_8] : memref<2x2x32xf32, #tpu.memory_space<vmem>>, vector<1x2x32xf32>
    %8 = vector.shape_cast %7 : vector<1x2x32xf32> to vector<2x32xf32>
    %9 = tpu.concatenate %4, %6 in 1 : vector<2x16xf32>, vector<2x32xf32> -> vector<2x48xf32>
    %10 = arith.truncf %9 : vector<2x48xf32> to vector<2x48xbf16>
    %c0_9 = arith.constant 0 : index
    %c0_10 = arith.constant 0 : index
    %11 = vector.load %arg4[%c0_9, %c0_10] : memref<48x128xbf16, #tpu.memory_space<vmem>>, vector<48x128xbf16>
    %cst = arith.constant dense<0.000000e+00> : vector<2x128xf32>
    %12 = tpu.matmul %10, %11, %cst {dimension_numbers = #tpu.dot_dimension_numbers<[1], [0], [0], [1], [0, 0, 1, 1], [], []>} : vector<2x48xbf16>, vector<48x128xbf16>, vector<2x128xf32> -> vector<2x128xf32>
    %c0_11 = arith.constant 0 : index
    %c0_12 = arith.constant 0 : index
    %13 = vector.load %arg5[%c0_11, %c0_12] : memref<1x128xf32, #tpu.memory_space<vmem>>, vector<1x128xf32>
    %14 = vector.broadcast %13 : vector<1x128xf32> to vector<2x128xf32>
    %15 = arith.addf %12, %14 : vector<2x128xf32>
    %16 = arith.negf %15 : vector<2x128xf32>
    %17 = math.exp %16 : vector<2x128xf32>
    %cst_13 = arith.constant 1.000000e+00 : f32
    %18 = vector.broadcast %cst_13 : f32 to vector<2x128xf32>
    %19 = arith.addf %18, %17 : vector<2x128xf32>
    %20 = arith.divf %18, %19 : vector<2x128xf32>
    %21 = math.tanh %15 : vector<2x128xf32>
    %22 = vector.extract_strided_slice %20 {offsets = [0, 0], sizes = [2, 32], strides = [1, 1]} : vector<2x128xf32> to vector<2x32xf32>
    %23 = vector.extract_strided_slice %20 {offsets = [0, 32], sizes = [2, 32], strides = [1, 1]} : vector<2x128xf32> to vector<2x32xf32>
    %24 = vector.extract_strided_slice %21 {offsets = [0, 64], sizes = [2, 32], strides = [1, 1]} : vector<2x128xf32> to vector<2x32xf32>
    %25 = vector.extract_strided_slice %20 {offsets = [0, 96], sizes = [2, 32], strides = [1, 1]} : vector<2x128xf32> to vector<2x32xf32>
    %26 = arith.mulf %23, %8 : vector<2x32xf32>
    %27 = arith.mulf %22, %24 : vector<2x32xf32>
    %28 = arith.addf %26, %27 : vector<2x32xf32>
    %29 = math.tanh %28 : vector<2x32xf32>
    %30 = arith.mulf %25, %29 : vector<2x32xf32>
    %c0_14 = arith.constant 0 : index
    %c0_15 = arith.constant 0 : index
    %c0_16 = arith.constant 0 : index
    %31 = vector.load %arg13[%c0_14, %c0_15, %c0_16] : memref<2x2x32xf32, #tpu.memory_space<vmem>>, vector<1x2x32xf32>
    %32 = vector.shape_cast %31 : vector<1x2x32xf32> to vector<2x32xf32>
    %33 = vector.shape_cast %30 : vector<2x32xf32> to vector<1x2x32xf32>
    tpu.vector_store %arg13[%c0_14, %c0_15, %c0_16], %33 {strides = array<i32>} : memref<2x2x32xf32, #tpu.memory_space<vmem>>, vector<1x2x32xf32>,
    %c0_17 = arith.constant 0 : index
    %c0_18 = arith.constant 0 : index
    %c0_19 = arith.constant 0 : index
    %34 = vector.load %arg14[%c0_17, %c0_18, %c0_19] : memref<2x2x32xf32, #tpu.memory_space<vmem>>, vector<1x2x32xf32>
    %35 = vector.shape_cast %34 : vector<1x2x32xf32> to vector<2x32xf32>
    %36 = vector.shape_cast %28 : vector<2x32xf32> to vector<1x2x32xf32>
    tpu.vector_store %arg14[%c0_17, %c0_18, %c0_19], %36 {strides = array<i32>} : memref<2x2x32xf32, #tpu.memory_space<vmem>>, vector<1x2x32xf32>,
    %c1 = arith.constant 1 : index
    %c0_20 = arith.constant 0 : index
    %c0_21 = arith.constant 0 : index
    %37 = vector.load %arg13[%c1, %c0_20, %c0_21] : memref<2x2x32xf32, #tpu.memory_space<vmem>>, vector<1x2x32xf32>
    %38 = vector.shape_cast %37 : vector<1x2x32xf32> to vector<2x32xf32>
    %c1_22 = arith.constant 1 : index
    %c0_23 = arith.constant 0 : index
    %c0_24 = arith.constant 0 : index
    %39 = vector.load %arg14[%c1_22, %c0_23, %c0_24] : memref<2x2x32xf32, #tpu.memory_space<vmem>>, vector<1x2x32xf32>
    %40 = vector.shape_cast %39 : vector<1x2x32xf32> to vector<2x32xf32>
    %41 = tpu.concatenate %30, %38 in 1 : vector<2x32xf32>, vector<2x32xf32> -> vector<2x64xf32>
    %42 = arith.truncf %41 : vector<2x64xf32> to vector<2x64xbf16>
    %c0_25 = arith.constant 0 : index
    %c0_26 = arith.constant 0 : index
    %43 = vector.load %arg6[%c0_25, %c0_26] : memref<64x128xbf16, #tpu.memory_space<vmem>>, vector<64x128xbf16>
    %cst_27 = arith.constant dense<0.000000e+00> : vector<2x128xf32>
    %44 = tpu.matmul %42, %43, %cst_27 {dimension_numbers = #tpu.dot_dimension_numbers<[1], [0], [0], [1], [0, 0, 1, 1], [], []>} : vector<2x64xbf16>, vector<64x128xbf16>, vector<2x128xf32> -> vector<2x128xf32>
    %c0_28 = arith.constant 0 : index
    %c0_29 = arith.constant 0 : index
    %45 = vector.load %arg7[%c0_28, %c0_29] : memref<1x128xf32, #tpu.memory_space<vmem>>, vector<1x128xf32>
    %46 = vector.broadcast %45 : vector<1x128xf32> to vector<2x128xf32>
    %47 = arith.addf %44, %46 : vector<2x128xf32>
    %48 = arith.negf %47 : vector<2x128xf32>
    %49 = math.exp %48 : vector<2x128xf32>
    %cst_30 = arith.constant 1.000000e+00 : f32
    %50 = vector.broadcast %cst_30 : f32 to vector<2x128xf32>
    %51 = arith.addf %50, %49 : vector<2x128xf32>
    %52 = arith.divf %50, %51 : vector<2x128xf32>
    %53 = math.tanh %47 : vector<2x128xf32>
    %54 = vector.extract_strided_slice %52 {offsets = [0, 0], sizes = [2, 32], strides = [1, 1]} : vector<2x128xf32> to vector<2x32xf32>
    %55 = vector.extract_strided_slice %52 {offsets = [0, 32], sizes = [2, 32], strides = [1, 1]} : vector<2x128xf32> to vector<2x32xf32>
    %56 = vector.extract_strided_slice %53 {offsets = [0, 64], sizes = [2, 32], strides = [1, 1]} : vector<2x128xf32> to vector<2x32xf32>
    %57 = vector.extract_strided_slice %52 {offsets = [0, 96], sizes = [2, 32], strides = [1, 1]} : vector<2x128xf32> to vector<2x32xf32>
    %58 = arith.mulf %55, %40 : vector<2x32xf32>
    %59 = arith.mulf %54, %56 : vector<2x32xf32>
    %60 = arith.addf %58, %59 : vector<2x32xf32>
    %61 = math.tanh %60 : vector<2x32xf32>
    %62 = arith.mulf %57, %61 : vector<2x32xf32>
    %c1_31 = arith.constant 1 : index
    %c0_32 = arith.constant 0 : index
    %c0_33 = arith.constant 0 : index
    %63 = vector.load %arg13[%c1_31, %c0_32, %c0_33] : memref<2x2x32xf32, #tpu.memory_space<vmem>>, vector<1x2x32xf32>
    %64 = vector.shape_cast %63 : vector<1x2x32xf32> to vector<2x32xf32>
    %65 = vector.shape_cast %62 : vector<2x32xf32> to vector<1x2x32xf32>
    tpu.vector_store %arg13[%c1_31, %c0_32, %c0_33], %65 {strides = array<i32>} : memref<2x2x32xf32, #tpu.memory_space<vmem>>, vector<1x2x32xf32>,
    %c1_34 = arith.constant 1 : index
    %c0_35 = arith.constant 0 : index
    %c0_36 = arith.constant 0 : index
    %66 = vector.load %arg14[%c1_34, %c0_35, %c0_36] : memref<2x2x32xf32, #tpu.memory_space<vmem>>, vector<1x2x32xf32>
    %67 = vector.shape_cast %66 : vector<1x2x32xf32> to vector<2x32xf32>
    %68 = vector.shape_cast %60 : vector<2x32xf32> to vector<1x2x32xf32>
    tpu.vector_store %arg14[%c1_34, %c0_35, %c0_36], %68 {strides = array<i32>} : memref<2x2x32xf32, #tpu.memory_space<vmem>>, vector<1x2x32xf32>,
    %c7_i32 = arith.constant 7 : i32
    %69 = arith.cmpi eq, %arg0, %c7_i32 : i32
    %70 = arith.extui %69 : i1 to i32
    %c0_i32_37 = arith.constant 0 : i32
    %71 = arith.cmpi ne, %70, %c0_i32_37 : i32
    scf.if %71 {
      %72 = arith.truncf %62 : vector<2x32xf32> to vector<2x32xbf16>
      %c0_38 = arith.constant 0 : index
      %c0_39 = arith.constant 0 : index
      %73 = vector.load %arg8[%c0_38, %c0_39] : memref<32x16xbf16, #tpu.memory_space<vmem>>, vector<32x16xbf16>
      %cst_40 = arith.constant dense<0.000000e+00> : vector<2x16xf32>
      %74 = tpu.matmul %72, %73, %cst_40 {dimension_numbers = #tpu.dot_dimension_numbers<[1], [0], [0], [1], [0, 0, 1, 1], [], []>} : vector<2x32xbf16>, vector<32x16xbf16>, vector<2x16xf32> -> vector<2x16xf32>
      %c0_41 = arith.constant 0 : index
      %c0_42 = arith.constant 0 : index
      %75 = vector.load %arg9[%c0_41, %c0_42] : memref<1x16xf32, #tpu.memory_space<vmem>>, vector<1x16xf32>
      %76 = vector.broadcast %75 : vector<1x16xf32> to vector<2x16xf32>
      %77 = arith.addf %74, %76 : vector<2x16xf32>
      %cst_43 = arith.constant 0.000000e+00 : f32
      %78 = vector.broadcast %cst_43 : f32 to vector<2x16xf32>
      %79 = arith.maximumf %77, %78 : vector<2x16xf32>
      %c0_44 = arith.constant 0 : index
      %c0_45 = arith.constant 0 : index
      %80 = vector.load %arg10[%c0_44, %c0_45] : memref<2x16xf32, #tpu.memory_space<vmem>>, vector<2x16xf32>
      tpu.vector_store %arg10[%c0_44, %c0_45], %79 {strides = array<i32>} : memref<2x16xf32, #tpu.memory_space<vmem>>, vector<2x16xf32>,
      %c0_46 = arith.constant 0 : index
      %c0_47 = arith.constant 0 : index
      %c0_48 = arith.constant 0 : index
      %81 = vector.load %arg13[%c0_46, %c0_47, %c0_48] : memref<2x2x32xf32, #tpu.memory_space<vmem>>, vector<2x2x32xf32>
      %c0_49 = arith.constant 0 : index
      %c0_50 = arith.constant 0 : index
      %c0_51 = arith.constant 0 : index
      %82 = vector.load %arg11[%c0_49, %c0_50, %c0_51] : memref<2x2x32xf32, #tpu.memory_space<vmem>>, vector<2x2x32xf32>
      tpu.vector_store %arg11[%c0_49, %c0_50, %c0_51], %81 {strides = array<i32>} : memref<2x2x32xf32, #tpu.memory_space<vmem>>, vector<2x2x32xf32>,
      %c0_52 = arith.constant 0 : index
      %c0_53 = arith.constant 0 : index
      %c0_54 = arith.constant 0 : index
      %83 = vector.load %arg14[%c0_52, %c0_53, %c0_54] : memref<2x2x32xf32, #tpu.memory_space<vmem>>, vector<2x2x32xf32>
      %c0_55 = arith.constant 0 : index
      %c0_56 = arith.constant 0 : index
      %c0_57 = arith.constant 0 : index
      %84 = vector.load %arg12[%c0_55, %c0_56, %c0_57] : memref<2x2x32xf32, #tpu.memory_space<vmem>>, vector<2x2x32xf32>
      tpu.vector_store %arg12[%c0_55, %c0_56, %c0_57], %83 {strides = array<i32>} : memref<2x2x32xf32, #tpu.memory_space<vmem>>, vector<2x2x32xf32>,
    } else {
    }
    return
  }
  func.func @transform_0(%arg0: i32) -> (i32, i32, i32) {
    %c0_i32 = arith.constant 0 : i32
    %c0_i32_0 = arith.constant 0 : i32
    %c0_i32_1 = arith.constant 0 : i32
    return %arg0, %c0_i32, %c0_i32_0 : i32, i32, i32
  }
  func.func @transform_1(%arg0: i32) -> (i32, i32, i32) {
    %c0_i32 = arith.constant 0 : i32
    %c0_i32_0 = arith.constant 0 : i32
    %c0_i32_1 = arith.constant 0 : i32
    %c0_i32_2 = arith.constant 0 : i32
    return %c0_i32, %c0_i32_0, %c0_i32_1 : i32, i32, i32
  }
  func.func @transform_2(%arg0: i32) -> (i32, i32, i32) {
    %c0_i32 = arith.constant 0 : i32
    %c0_i32_0 = arith.constant 0 : i32
    %c0_i32_1 = arith.constant 0 : i32
    %c0_i32_2 = arith.constant 0 : i32
    return %c0_i32, %c0_i32_0, %c0_i32_1 : i32, i32, i32
  }
  func.func @transform_3(%arg0: i32) -> (i32, i32) {
    %c0_i32 = arith.constant 0 : i32
    %c0_i32_0 = arith.constant 0 : i32
    %c0_i32_1 = arith.constant 0 : i32
    return %c0_i32, %c0_i32_0 : i32, i32
  }
  func.func @transform_4(%arg0: i32) -> (i32, i32) {
    %c0_i32 = arith.constant 0 : i32
    %c0_i32_0 = arith.constant 0 : i32
    %c0_i32_1 = arith.constant 0 : i32
    return %c0_i32, %c0_i32_0 : i32, i32
  }
  func.func @transform_5(%arg0: i32) -> (i32, i32) {
    %c0_i32 = arith.constant 0 : i32
    %c0_i32_0 = arith.constant 0 : i32
    %c0_i32_1 = arith.constant 0 : i32
    return %c0_i32, %c0_i32_0 : i32, i32
  }
  func.func @transform_6(%arg0: i32) -> (i32, i32) {
    %c0_i32 = arith.constant 0 : i32
    %c0_i32_0 = arith.constant 0 : i32
    %c0_i32_1 = arith.constant 0 : i32
    return %c0_i32, %c0_i32_0 : i32, i32
  }
  func.func @transform_7(%arg0: i32) -> (i32, i32) {
    %c0_i32 = arith.constant 0 : i32
    %c0_i32_0 = arith.constant 0 : i32
    %c0_i32_1 = arith.constant 0 : i32
    return %c0_i32, %c0_i32_0 : i32, i32
  }
  func.func @transform_8(%arg0: i32) -> (i32, i32) {
    %c0_i32 = arith.constant 0 : i32
    %c0_i32_0 = arith.constant 0 : i32
    %c0_i32_1 = arith.constant 0 : i32
    return %c0_i32, %c0_i32_0 : i32, i32
  }
  func.func @transform_9(%arg0: i32) -> (i32, i32) {
    %c0_i32 = arith.constant 0 : i32
    %c0_i32_0 = arith.constant 0 : i32
    %c0_i32_1 = arith.constant 0 : i32
    return %c0_i32, %c0_i32_0 : i32, i32
  }
  func.func @transform_10(%arg0: i32) -> (i32, i32, i32) {
    %c0_i32 = arith.constant 0 : i32
    %c0_i32_0 = arith.constant 0 : i32
    %c0_i32_1 = arith.constant 0 : i32
    %c0_i32_2 = arith.constant 0 : i32
    return %c0_i32, %c0_i32_0, %c0_i32_1 : i32, i32, i32
  }
  func.func @transform_11(%arg0: i32) -> (i32, i32, i32) {
    %c0_i32 = arith.constant 0 : i32
    %c0_i32_0 = arith.constant 0 : i32
    %c0_i32_1 = arith.constant 0 : i32
    %c0_i32_2 = arith.constant 0 : i32
    return %c0_i32, %c0_i32_0, %c0_i32_1 : i32, i32, i32
  }
}

</mosaic_0001>

<llo_original>
// kernel: lstm_decoder_forward.1
$region0: #{lstm_decoder_forward.1}
  #allocation0 [shape = 'u32[]', space=smem, size = 0x4, offset = 0x4, fixed_abs, tag = 'smem constant byte address 0x4 - core index']
  #allocation1 [shape = 'u32[144,128]{1,0:T(1,128)}', space=vmem, size = 0x12000, scoped, tag = 'internal scratch']
  #allocation2 [shape = 'f32[2,2,32]{2,1,0:T(2,128)}', space=vmem, size = 0x800, scoped, tag = 'scratch operand']
  #allocation3 [shape = 'f32[2,2,32]{2,1,0:T(2,128)}', space=vmem, size = 0x800, scoped, tag = 'scratch operand']
  %s0 = inlined_call_operand.vmem [shape: f32[8,2,16], index: 0, kind: input, shape index: {}]
  %s1 = inlined_call_operand.hbm [shape: f32[2,2,32], index: 1, kind: input, shape index: {}]
  %s2 = inlined_call_operand.hbm [shape: f32[2,2,32], index: 2, kind: input, shape index: {}]
  %s3 = inlined_call_operand.vmem [shape: bf16[48,128], index: 3, kind: input, shape index: {}]
  %s4 = inlined_call_operand.vmem [shape: f32[1,128], index: 4, kind: input, shape index: {}]
  %s5 = inlined_call_operand.vmem [shape: bf16[64,128], index: 5, kind: input, shape index: {}]
  %s6 = inlined_call_operand.vmem [shape: f32[1,128], index: 6, kind: input, shape index: {}]
  %s7 = inlined_call_operand.vmem [shape: bf16[32,16], index: 7, kind: input, shape index: {}]
  %s8 = inlined_call_operand.vmem [shape: f32[1,16], index: 8, kind: input, shape index: {}]
  %s9 = inlined_call_operand.hbm [shape: f32[2,16], index: 9, kind: output, shape index: {0}]
  %s10 = inlined_call_operand.hbm [shape: f32[2,2,32], index: 10, kind: output, shape index: {1}]
  %s11 = inlined_call_operand.hbm [shape: f32[2,2,32], index: 11, kind: output, shape index: {2}]
  %12 = xla_tuple %s9, %s10, %s11
  %s13 = sld [smem:[#allocation0]]
  $region101: #{lstm_decoder_forward.1} parent=0
    _
  %s15 = ssub.s32 1, %s13
  %s16 = scalar_select 0, %s15, %s13
  $region1: #{lstm_decoder_forward.1} parent=0
    #allocation4 [shape = 'u8[2048]{0}', space=vmem, size = 0x800, scoped, tag = 'input window, operand 1, single buffered']
    #allocation5 [shape = 's32[2]{0}', space=sflag, size = 0x8, scoped, tag = 'scoped memory for lstm_decoder_forward.1']
    #allocation6 [shape = 's32[2]{0}', space=sflag, size = 0x8, scoped, tag = 'scoped memory for lstm_decoder_forward.1']
    #allocation7 [shape = 'u8[2048]{0}', space=vmem, size = 0x800, scoped, tag = 'input window, operand 2, single buffered']
    #allocation8 [shape = 's32[1]{0}', space=sflag, size = 0x4, scoped, tag = 'scoped memory for lstm_decoder_forward.1']
    #allocation9 [shape = 'u8[1024]{0}', space=vmem, size = 0x400, scoped, tag = 'output window, operand 0, single buffered']
    #allocation10 [shape = 'u8[2048]{0}', space=vmem, size = 0x800, scoped, tag = 'output window, operand 1, single buffered']
    #allocation11 [shape = 's32[1]{0}', space=sflag, size = 0x4, scoped, tag = 'scoped memory for lstm_decoder_forward.1']
    #allocation12 [shape = 'u8[2048]{0}', space=vmem, size = 0x800, scoped, tag = 'output window, operand 2, single buffered']
    %17 = vsyncpa [#allocation5], 0
    %18 = vsyncpa [#allocation8], 0
    %19 = vsyncpa [#allocation6], 0
    %20 = vsyncpa [#allocation11], 0
    loop: start=0, step=1, limit=10
    $region2: #{lstm_decoder_forward.1} parent=1 // loop_pre_header
      _
    $region3: #{lstm_decoder_forward.1} parent=1 // loop_header
      %s22 = sphi 0, %s26
      %p23 = scmp.ge.s32.totalorder %s22, 10
      %s32 = sphi 0, %s34
      %s35 = sphi 0, %s32
      %s36 = sphi 0, %s35
      %s52 = sphi 0, %s36
      %s56 = sphi 0, %s56
      %s58 = sphi 0, %s56
      %s59 = sphi 0, %s58
      %s73 = sphi 0, %s59
      %s77 = sphi 0, %s77
      %s79 = sphi 0, %s77
      %s80 = sphi 0, %s79
      %s94 = sphi 0, %s80
      %s98 = sphi 0, %s98
      %s100 = sphi 0, %s98
      %s101 = sphi 0, %s100
      %s115 = sphi 0, %s101
      %s119 = sphi 0, %s119
      %s121 = sphi 0, %s119
      %s122 = sphi 0, %s121
      %s136 = sphi 0, %s122
      %s140 = sphi 0, %s140
      %s142 = sphi 0, %s140
      %s143 = sphi 0, %s142
      %s157 = sphi 0, %s143
      %s161 = sphi 0, %s161
      %s163 = sphi 0, %s161
      %s164 = sphi 0, %s163
      %s178 = sphi 0, %s164
      %s182 = sphi 0, %s182
      %s184 = sphi 0, %s182
      %s185 = sphi 0, %s184
      %s199 = sphi 0, %s185
      %s203 = sphi 0, %s203
      %s205 = sphi 0, %s203
      %s206 = sphi 0, %s205
      %s220 = sphi 0, %s206
      %s224 = sphi 0, %s224
      %s226 = sphi 0, %s224
      %s227 = sphi 0, %s226
      %s241 = sphi 0, %s227
      %s245 = sphi 0, %s245
      %s247 = sphi 0, %s245
      %s248 = sphi 0, %s247
      %s262 = sphi 0, %s248
      %s266 = sphi 0, %s266
      %s268 = sphi 0, %s266
      %s269 = sphi 0, %s268
      %s283 = sphi 0, %s269
    $region4: #{lstm_decoder_forward.1} parent=1 // loop_header_branch
      %25 = sbr.rel (%p23) target = $region8
    $region5: #{lstm_decoder_forward.1} parent=1 // loop_body
      %s27 = ssub.s32 %s22, 1
      %s28 = ssub.s32 %s22, 2
      %s29 = sadd.s32 %s22, 1
      %s30 = ssub.s32 %s22, %s29
      %p31 = scmp.eq.s32.totalorder %s30, 0
      %s33 = sadd.s32 %s32, 1
      %s34 = scalar_select %p31, %s32, %s33
      %p37 = pneg %p31
      %p38 = scmp.eq.s32.totalorder %s22, 7
      %p39 = por %p37, %p38
      %p40 = scmp.ne.s32.totalorder %s32, %s35
      %p41 = scmp.eq.s32.totalorder %s22, 0
      %p42 = por %p40, %p41
      %p43 = scmp.ne.s32.totalorder %s32, %s35
      %p44 = scmp.eq.s32.totalorder %s27, 7
      %p45 = por %p43, %p44
      %p46 = scmp.ne.s32.totalorder %s35, %s36
      %p47 = scmp.eq.s32.totalorder %s27, 0
      %p48 = por %p46, %p47
      %p49 = scmp.ne.s32.totalorder %s35, %s36
      %p50 = scmp.eq.s32.totalorder %s28, 7
      %p51 = por %p49, %p50
      %p53 = scmp.ne.s32.totalorder %s36, %s52
      %p54 = scmp.eq.s32.totalorder %s28, 0
      %p55 = por %p53, %p54
      %s57 = sadd.s32 %s56, 1
      %p60 = scmp.eq.s32.totalorder %s22, 7
      %p61 = scmp.ne.s32.totalorder %s56, %s58
      %p62 = scmp.eq.s32.totalorder %s22, 0
      %p63 = por %p61, %p62
      %p64 = scmp.ne.s32.totalorder %s56, %s58
      %p65 = scmp.eq.s32.totalorder %s27, 7
      %p66 = por %p64, %p65
      %p67 = scmp.ne.s32.totalorder %s58, %s59
      %p68 = scmp.eq.s32.totalorder %s27, 0
      %p69 = por %p67, %p68
      %p70 = scmp.ne.s32.totalorder %s58, %s59
      %p71 = scmp.eq.s32.totalorder %s28, 7
      %p72 = por %p70, %p71
      %p74 = scmp.ne.s32.totalorder %s59, %s73
      %p75 = scmp.eq.s32.totalorder %s28, 0
      %p76 = por %p74, %p75
      %s78 = sadd.s32 %s77, 1
      %p81 = scmp.eq.s32.totalorder %s22, 7
      %p82 = scmp.ne.s32.totalorder %s77, %s79
      %p83 = scmp.eq.s32.totalorder %s22, 0
      %p84 = por %p82, %p83
      %p85 = scmp.ne.s32.totalorder %s77, %s79
      %p86 = scmp.eq.s32.totalorder %s27, 7
      %p87 = por %p85, %p86
      %p88 = scmp.ne.s32.totalorder %s79, %s80
      %p89 = scmp.eq.s32.totalorder %s27, 0
      %p90 = por %p88, %p89
      %p91 = scmp.ne.s32.totalorder %s79, %s80
      %p92 = scmp.eq.s32.totalorder %s28, 7
      %p93 = por %p91, %p92
      %p95 = scmp.ne.s32.totalorder %s80, %s94
      %p96 = scmp.eq.s32.totalorder %s28, 0
      %p97 = por %p95, %p96
      %s99 = sadd.s32 %s98, 1
      %p102 = scmp.eq.s32.totalorder %s22, 7
      %p103 = scmp.ne.s32.totalorder %s98, %s100
      %p104 = scmp.eq.s32.totalorder %s22, 0
      %p105 = por %p103, %p104
      %p106 = scmp.ne.s32.totalorder %s98, %s100
      %p107 = scmp.eq.s32.totalorder %s27, 7
      %p108 = por %p106, %p107
      %p109 = scmp.ne.s32.totalorder %s100, %s101
      %p110 = scmp.eq.s32.totalorder %s27, 0
      %p111 = por %p109, %p110
      %p112 = scmp.ne.s32.totalorder %s100, %s101
      %p113 = scmp.eq.s32.totalorder %s28, 7
      %p114 = por %p112, %p113
      %p116 = scmp.ne.s32.totalorder %s101, %s115
      %p117 = scmp.eq.s32.totalorder %s28, 0
      %p118 = por %p116, %p117
      %s120 = sadd.s32 %s119, 1
      %p123 = scmp.eq.s32.totalorder %s22, 7
      %p124 = scmp.ne.s32.totalorder %s119, %s121
      %p125 = scmp.eq.s32.totalorder %s22, 0
      %p126 = por %p124, %p125
      %p127 = scmp.ne.s32.totalorder %s119, %s121
      %p128 = scmp.eq.s32.totalorder %s27, 7
      %p129 = por %p127, %p128
      %p130 = scmp.ne.s32.totalorder %s121, %s122
      %p131 = scmp.eq.s32.totalorder %s27, 0
      %p132 = por %p130, %p131
      %p133 = scmp.ne.s32.totalorder %s121, %s122
      %p134 = scmp.eq.s32.totalorder %s28, 7
      %p135 = por %p133, %p134
      %p137 = scmp.ne.s32.totalorder %s122, %s136
      %p138 = scmp.eq.s32.totalorder %s28, 0
      %p139 = por %p137, %p138
      %s141 = sadd.s32 %s140, 1
      %p144 = scmp.eq.s32.totalorder %s22, 7
      %p145 = scmp.ne.s32.totalorder %s140, %s142
      %p146 = scmp.eq.s32.totalorder %s22, 0
      %p147 = por %p145, %p146
      %p148 = scmp.ne.s32.totalorder %s140, %s142
      %p149 = scmp.eq.s32.totalorder %s27, 7
      %p150 = por %p148, %p149
      %p151 = scmp.ne.s32.totalorder %s142, %s143
      %p152 = scmp.eq.s32.totalorder %s27, 0
      %p153 = por %p151, %p152
      %p154 = scmp.ne.s32.totalorder %s142, %s143
      %p155 = scmp.eq.s32.totalorder %s28, 7
      %p156 = por %p154, %p155
      %p158 = scmp.ne.s32.totalorder %s143, %s157
      %p159 = scmp.eq.s32.totalorder %s28, 0
      %p160 = por %p158, %p159
      %s162 = sadd.s32 %s161, 1
      %p165 = scmp.eq.s32.totalorder %s22, 7
      %p166 = scmp.ne.s32.totalorder %s161, %s163
      %p167 = scmp.eq.s32.totalorder %s22, 0
      %p168 = por %p166, %p167
      %p169 = scmp.ne.s32.totalorder %s161, %s163
      %p170 = scmp.eq.s32.totalorder %s27, 7
      %p171 = por %p169, %p170
      %p172 = scmp.ne.s32.totalorder %s163, %s164
      %p173 = scmp.eq.s32.totalorder %s27, 0
      %p174 = por %p172, %p173
      %p175 = scmp.ne.s32.totalorder %s163, %s164
      %p176 = scmp.eq.s32.totalorder %s28, 7
      %p177 = por %p175, %p176
      %p179 = scmp.ne.s32.totalorder %s164, %s178
      %p180 = scmp.eq.s32.totalorder %s28, 0
      %p181 = por %p179, %p180
      %s183 = sadd.s32 %s182, 1
      %p186 = scmp.eq.s32.totalorder %s22, 7
      %p187 = scmp.ne.s32.totalorder %s182, %s184
      %p188 = scmp.eq.s32.totalorder %s22, 0
      %p189 = por %p187, %p188
      %p190 = scmp.ne.s32.totalorder %s182, %s184
      %p191 = scmp.eq.s32.totalorder %s27, 7
      %p192 = por %p190, %p191
      %p193 = scmp.ne.s32.totalorder %s184, %s185
      %p194 = scmp.eq.s32.totalorder %s27, 0
      %p195 = por %p193, %p194
      %p196 = scmp.ne.s32.totalorder %s184, %s185
      %p197 = scmp.eq.s32.totalorder %s28, 7
      %p198 = por %p196, %p197
      %p200 = scmp.ne.s32.totalorder %s185, %s199
      %p201 = scmp.eq.s32.totalorder %s28, 0
      %p202 = por %p200, %p201
      %s204 = sadd.s32 %s203, 1
      %p207 = scmp.eq.s32.totalorder %s22, 7
      %p208 = scmp.ne.s32.totalorder %s203, %s205
      %p209 = scmp.eq.s32.totalorder %s22, 0
      %p210 = por %p208, %p209
      %p211 = scmp.ne.s32.totalorder %s203, %s205
      %p212 = scmp.eq.s32.totalorder %s27, 7
      %p213 = por %p211, %p212
      %p214 = scmp.ne.s32.totalorder %s205, %s206
      %p215 = scmp.eq.s32.totalorder %s27, 0
      %p216 = por %p214, %p215
      %p217 = scmp.ne.s32.totalorder %s205, %s206
      %p218 = scmp.eq.s32.totalorder %s28, 7
      %p219 = por %p217, %p218
      %p221 = scmp.ne.s32.totalorder %s206, %s220
      %p222 = scmp.eq.s32.totalorder %s28, 0
      %p223 = por %p221, %p222
      %s225 = sadd.s32 %s224, 1
      %p228 = scmp.eq.s32.totalorder %s22, 7
      %p229 = scmp.ne.s32.totalorder %s224, %s226
      %p230 = scmp.eq.s32.totalorder %s22, 0
      %p231 = por %p229, %p230
      %p232 = scmp.ne.s32.totalorder %s224, %s226
      %p233 = scmp.eq.s32.totalorder %s27, 7
      %p234 = por %p232, %p233
      %p235 = scmp.ne.s32.totalorder %s226, %s227
      %p236 = scmp.eq.s32.totalorder %s27, 0
      %p237 = por %p235, %p236
      %p238 = scmp.ne.s32.totalorder %s226, %s227
      %p239 = scmp.eq.s32.totalorder %s28, 7
      %p240 = por %p238, %p239
      %p242 = scmp.ne.s32.totalorder %s227, %s241
      %p243 = scmp.eq.s32.totalorder %s28, 0
      %p244 = por %p242, %p243
      %s246 = sadd.s32 %s245, 1
      %p249 = scmp.eq.s32.totalorder %s22, 7
      %p250 = scmp.ne.s32.totalorder %s245, %s247
      %p251 = scmp.eq.s32.totalorder %s22, 0
      %p252 = por %p250, %p251
      %p253 = scmp.ne.s32.totalorder %s245, %s247
      %p254 = scmp.eq.s32.totalorder %s27, 7
      %p255 = por %p253, %p254
      %p256 = scmp.ne.s32.totalorder %s247, %s248
      %p257 = scmp.eq.s32.totalorder %s27, 0
      %p258 = por %p256, %p257
      %p259 = scmp.ne.s32.totalorder %s247, %s248
      %p260 = scmp.eq.s32.totalorder %s28, 7
      %p261 = por %p259, %p260
      %p263 = scmp.ne.s32.totalorder %s248, %s262
      %p264 = scmp.eq.s32.totalorder %s28, 0
      %p265 = por %p263, %p264
      %s267 = sadd.s32 %s266, 1
      %p270 = scmp.eq.s32.totalorder %s22, 7
      %p271 = scmp.ne.s32.totalorder %s266, %s268
      %p272 = scmp.eq.s32.totalorder %s22, 0
      %p273 = por %p271, %p272
      %p274 = scmp.ne.s32.totalorder %s266, %s268
      %p275 = scmp.eq.s32.totalorder %s27, 7
      %p276 = por %p274, %p275
      %p277 = scmp.ne.s32.totalorder %s268, %s269
      %p278 = scmp.eq.s32.totalorder %s27, 0
      %p279 = por %p277, %p278
      %p280 = scmp.ne.s32.totalorder %s268, %s269
      %p281 = scmp.eq.s32.totalorder %s28, 7
      %p282 = por %p280, %p281
      %p284 = scmp.ne.s32.totalorder %s269, %s283
      %p285 = scmp.eq.s32.totalorder %s28, 0
      %p286 = por %p284, %p285
      %p287 = scmp.le.s32.totalorder 1, %s22
      %p288 = scmp.lt.s32.totalorder %s22, 9
      %p289 = pnand %p287, %p288
      %p290 = pneg %p289
      // Predicated region
      $region9: #{lstm_decoder_forward.1} parent=5 // pred_check
        _
      $region10: #{lstm_decoder_forward.1} parent=5 // pred_check_branch
        %292 = sbr.rel (%p289) target = $region12
      $region11: #{lstm_decoder_forward.1} parent=5 // pred_region
        %s293 = ssub.s32 %s22, 1
        // Predicated region
        $region13: #{lstm_decoder_forward.1} parent=11 // pred_check
          %p294 = pneg %p69
        $region14: #{lstm_decoder_forward.1} parent=11 // pred_check_branch
          %296 = sbr.rel (%p294) target = $region16
        $region15: #{lstm_decoder_forward.1} parent=11 // pred_region
          %s298 = ssub.s32 64, 64
          %299 = vsyncadd [#allocation5], %s298
          %s300 = sshll.u32 [#allocation4], 4
          %s301 = int_to_ptr.vmem [resolvable:$true] %s300
          %306 = dma.hbm_to_vmem [thread:$0]  %s1, 64, %s301, [#allocation5], 32, 32, 2
        $region16: #{lstm_decoder_forward.1} parent=11 // pred_fallthru
          _
        // Predicated region
        $region17: #{lstm_decoder_forward.1} parent=11 // pred_check
          %p307 = pneg %p90
        $region18: #{lstm_decoder_forward.1} parent=11 // pred_check_branch
          %309 = sbr.rel (%p307) target = $region20
        $region19: #{lstm_decoder_forward.1} parent=11 // pred_region
          %s311 = ssub.s32 64, 64
          %312 = vsyncadd [#allocation8], %s311
          %s313 = sshll.u32 [#allocation7], 4
          %s314 = int_to_ptr.vmem [resolvable:$true] %s313
          %319 = dma.hbm_to_vmem [thread:$0]  %s2, 64, %s314, [#allocation8], 32, 32, 2
        $region20: #{lstm_decoder_forward.1} parent=11 // pred_fallthru
          _
        // Predicated region
        $region21: #{lstm_decoder_forward.1} parent=11 // pred_check
          %p320 = pneg %p111
        $region22: #{lstm_decoder_forward.1} parent=11 // pred_check_branch
          %322 = sbr.rel (%p320) target = $region24
        $region23: #{lstm_decoder_forward.1} parent=11 // pred_region
          _
        $region24: #{lstm_decoder_forward.1} parent=11 // pred_fallthru
          _
        // Predicated region
        $region25: #{lstm_decoder_forward.1} parent=11 // pred_check
          %p323 = pneg %p132
        $region26: #{lstm_decoder_forward.1} parent=11 // pred_check_branch
          %325 = sbr.rel (%p323) target = $region28
        $region27: #{lstm_decoder_forward.1} parent=11 // pred_region
          _
        $region28: #{lstm_decoder_forward.1} parent=11 // pred_fallthru
          _
        // Predicated region
        $region29: #{lstm_decoder_forward.1} parent=11 // pred_check
          %p326 = pneg %p153
        $region30: #{lstm_decoder_forward.1} parent=11 // pred_check_branch
          %328 = sbr.rel (%p326) target = $region32
        $region31: #{lstm_decoder_forward.1} parent=11 // pred_region
          _
        $region32: #{lstm_decoder_forward.1} parent=11 // pred_fallthru
          _
        // Predicated region
        $region33: #{lstm_decoder_forward.1} parent=11 // pred_check
          %p329 = pneg %p174
        $region34: #{lstm_decoder_forward.1} parent=11 // pred_check_branch
          %331 = sbr.rel (%p329) target = $region36
        $region35: #{lstm_decoder_forward.1} parent=11 // pred_region
          _
        $region36: #{lstm_decoder_forward.1} parent=11 // pred_fallthru
          _
        // Predicated region
        $region37: #{lstm_decoder_forward.1} parent=11 // pred_check
          %p332 = pneg %p195
        $region38: #{lstm_decoder_forward.1} parent=11 // pred_check_branch
          %334 = sbr.rel (%p332) target = $region40
        $region39: #{lstm_decoder_forward.1} parent=11 // pred_region
          _
        $region40: #{lstm_decoder_forward.1} parent=11 // pred_fallthru
          _
        // Predicated region
        $region41: #{lstm_decoder_forward.1} parent=11 // pred_check
          %p335 = pneg %p216
        $region42: #{lstm_decoder_forward.1} parent=11 // pred_check_branch
          %337 = sbr.rel (%p335) target = $region44
        $region43: #{lstm_decoder_forward.1} parent=11 // pred_region
          _
        $region44: #{lstm_decoder_forward.1} parent=11 // pred_fallthru
          _
      $region12: #{lstm_decoder_forward.1} parent=5 // pred_fallthru
        _
      %p338 = scmp.lt.s32.totalorder %s22, 8
      // Predicated region
      $region45: #{lstm_decoder_forward.1} parent=5 // pred_check
        %p339 = pneg %p338
      $region46: #{lstm_decoder_forward.1} parent=5 // pred_check_branch
        %341 = sbr.rel (%p339) target = $region48
      $region47: #{lstm_decoder_forward.1} parent=5 // pred_region
        // Predicated region
        $region49: #{lstm_decoder_forward.1} parent=47 // pred_check
          %p342 = pneg %p42
        $region50: #{lstm_decoder_forward.1} parent=47 // pred_check_branch
          %344 = sbr.rel (%p342) target = $region52
        $region51: #{lstm_decoder_forward.1} parent=47 // pred_region
          %p345 = scmp.lt.s32.totalorder %s22, 7
          %s346 = scalar_select %p345, %s22, 7
          %s347 = smul.addr %s346, 2
          %s348 = scalar_lea.vmem %s0, %s347
        $region52: #{lstm_decoder_forward.1} parent=47 // pred_fallthru
          _
      $region48: #{lstm_decoder_forward.1} parent=5 // pred_fallthru
        _
      %p349 = scmp.le.s32.totalorder 1, %s22
      %p350 = scmp.lt.s32.totalorder %s22, 9
      %p351 = pnand %p349, %p350
      %p352 = pneg %p351
      // Predicated region
      $region53: #{lstm_decoder_forward.1} parent=5 // pred_check
        _
      $region54: #{lstm_decoder_forward.1} parent=5 // pred_check_branch
        %354 = sbr.rel (%p351) target = $region56
      $region55: #{lstm_decoder_forward.1} parent=5 // pred_region
        %s355 = ssub.s32 %s22, 1
        // Predicated region
        $region57: #{lstm_decoder_forward.1} parent=55 // pred_check
          %p356 = pneg %p69
        $region58: #{lstm_decoder_forward.1} parent=55 // pred_check_branch
          %358 = sbr.rel (%p356) target = $region60
        $region59: #{lstm_decoder_forward.1} parent=55 // pred_region
          %359 = dma.done [#allocation5], 64
        $region60: #{lstm_decoder_forward.1} parent=55 // pred_fallthru
          _
        // Predicated region
        $region61: #{lstm_decoder_forward.1} parent=55 // pred_check
          %p360 = pneg %p90
        $region62: #{lstm_decoder_forward.1} parent=55 // pred_check_branch
          %362 = sbr.rel (%p360) target = $region64
        $region63: #{lstm_decoder_forward.1} parent=55 // pred_region
          %363 = dma.done [#allocation8], 64
        $region64: #{lstm_decoder_forward.1} parent=55 // pred_fallthru
          _
        %p364 = scmp.lt.s32.totalorder %s27, 7
        %s365 = scalar_select %p364, %s27, 7
        %s366 = smul.addr %s365, 2
        %s367 = scalar_lea.vmem %s0, %s366
        %p368 = pneg %p48
        %p369 = pneg %p45
        %p370 = pneg %p69
        %p371 = pneg %p66
        %p372 = pneg %p90
        %p373 = pneg %p87
        %p374 = pneg %p111
        %p375 = pneg %p108
        %p376 = pneg %p132
        %p377 = pneg %p129
        %p378 = pneg %p153
        %p379 = pneg %p150
        %p380 = pneg %p174
        %p381 = pneg %p171
        %p382 = pneg %p195
        %p383 = pneg %p192
        %p384 = pneg %p216
        %p385 = pneg %p213
        %p386 = pneg %p237
        %p387 = pneg %p234
        %p388 = pneg %p258
        %p389 = pneg %p255
        %p390 = pneg %p279
        %p391 = pneg %p276
        %p392 = scmp.lt.s32.totalorder %s27, 7
        %s393 = scalar_select %p392, %s27, 7
        %s394 = smul.addr %s393, 2
        %s395 = scalar_lea.vmem %s0, %s394
        %p397 = scmp.eq.s32.totalorder %s27, 0
        // Predicated region
        $region65: #{lstm_decoder_forward.1} parent=55 // pred_check
          %p398 = pneg %p397
        $region66: #{lstm_decoder_forward.1} parent=55 // pred_check_branch
          %400 = sbr.rel (%p398) target = $region68
        $region67: #{lstm_decoder_forward.1} parent=55 // pred_region
          %v401 = vld [vmem:[#allocation4] sm:$0x3]
          %v402 = vld [vmem:[#allocation4 + $0x2] sm:$0x3]
          %vm403 = vcmask 254976
          %404 = vst.msk [vmem:[#allocation2] sm:$0x3] %vm403, %v401
          %405 = vst.msk [vmem:[#allocation2 + $0x2] sm:$0x3] %vm403, %v402
          %v406 = vld [vmem:[#allocation7] sm:$0x3]
          %v407 = vld [vmem:[#allocation7 + $0x2] sm:$0x3]
          %408 = vst.msk [vmem:[#allocation3] sm:$0x3] %vm403, %v406
          %409 = vst.msk [vmem:[#allocation3 + $0x2] sm:$0x3] %vm403, %v407
        $region68: #{lstm_decoder_forward.1} parent=55 // pred_fallthru
          _
        %v410 = vld [vmem:[%s395] sm:$0x3]
        %v411 = vld [vmem:[#allocation2] sm:$0x3]
        %v412 = vld [vmem:[#allocation3] sm:$0x3]
        %414 = vrot.lane.b32.xlu0 %v411, 16
        %v415 = vpop.permute.xlu0 %414
        %vm417 = vcmask 130048
        %v418 = vsel %vm417, %v410, %v415
        %v419 = vpack.c.bf16 %v418, %v418
        %v420 = vld [vmem:[%s3] sm:$0xf]
        %v421 = vld [vmem:[%s3 + $0x4] sm:$0xf]
        %v422 = vld [vmem:[%s3 + $0x8] sm:$0xf]
        %v423 = vld [vmem:[%s3 + $0xc] sm:$0xf]
        %v424 = vld [vmem:[%s3 + $0x10] sm:$0xf]
        %v425 = vld [vmem:[%s3 + $0x14] sm:$0xf]
        %v426 = vld [vmem:[%s4] sm:$0x1]
        %v428 = vlaneseq
        %v429 = vshrl.u32 %v428, 7
        %v430 = vsub.s32 0, %v429
        %v431 = vrot.slane %v426, %v430
        %v439 = vunpack.c.l.b16 %v420
        %v440 = vunpack.c.l.b16 %v421
        %v441 = vunpack.c.l.b16 %v422
        %v442 = vunpack.c.l.b16 %v423
        %v443 = vunpack.c.l.b16 %v424
        %v444 = vunpack.c.l.b16 %v425
        %v445 = vpack.c.b16 %v440, %v439
        %v446 = vpack.c.b16 %v442, %v441
        %v447 = vpack.c.b16 %v444, %v443
        %vm451 = vcmask 392192
        %v453 = vsel %vm451, %v419, 0
        %455 = vmatprep.subr.bf16.mxu0 0
        %456 = vmatpush1.bf16.msra.mxu0 %v445
        %457 = vmatprep.subr.bf16.mxu0 0
        %458 = vmatpush1.bf16.msra.mxu0 %v446
        %459 = vmatprep.subr.bf16.mxu0 0
        %460 = vmatpush1.bf16.msra.mxu0 %v447
        %461 = vmatprep.subr.bf16.mxu0 0
        %462 = vmatpush1.bf16.msra.mxu0 0
        %463 = vmatprep.subr.bf16.mxu0 0
        %464 = vmatpush1.bf16.msra.mxu0 0
        %465 = vmatprep.subr.bf16.mxu0 0
        %466 = vmatpush1.bf16.msra.mxu0 0
        %467 = vmatprep.subr.bf16.mxu0 0
        %468 = vmatpush1.bf16.msra.mxu0 0
        %469 = vmatprep.subr.bf16.mxu0 0
        %470 = vmatpush1.bf16.msra.mxu0 0
        %471 = vmatprep.subr.bf16.mxu0 0
        %472 = vmatpush1.bf16.msra.mxu0 0
        %473 = vmatprep.subr.bf16.mxu0 0
        %474 = vmatpush1.bf16.msra.mxu0 0
        %475 = vmatprep.subr.bf16.mxu0 0
        %476 = vmatpush1.bf16.msra.mxu0 0
        %477 = vmatprep.subr.bf16.mxu0 0
        %478 = vmatpush1.bf16.msra.mxu0 0
        %479 = vmatprep.subr.bf16.mxu0 0
        %480 = vmatpush1.bf16.msra.mxu0 0
        %481 = vmatprep.subr.bf16.mxu0 0
        %482 = vmatpush1.bf16.msra.mxu0 0
        %483 = vmatprep.subr.bf16.mxu0 0
        %484 = vmatpush1.bf16.msra.mxu0 0
        %485 = vmatprep.subr.bf16.mxu0 0
        %486 = vmatpush1.bf16.msra.mxu0 0
        %487 = vmatprep.mubr.bf16.mxu0 0
        %488 = vmatmul.mubr.bf16.gmra.mrb[0].mxu0 %v453
        %v489 = vpop.f32.mrb[0].mxu0
        %v490 = vadd.f32 %v431, %v489
        %v491 = vpop.f32.mrb[0].mxu0
        %v492 = vpop.f32.mrb[0].mxu0
        %v493 = vpop.f32.mrb[0].mxu0
        %494 = vdwg.mxu0
        %v495 = vxor.u32 %v490, 2147483648
        %v496 = vmul.f32 %v495, 1.442695
        %v497 = vpow.pop %v496
        %v498 = vadd.f32 %v497, 1.0
        %v499 = vrcp.pop %v498
        %v500 = vmul.f32 1.0, %v499
        %v501 = vtanh.pop %v490
        %503 = vrot.lane.b32.xlu0 %v412, 32
        %v504 = vpop.permute.xlu0 %503
        %v506 = vmul.f32 %v500, %v504
        %508 = vrot.lane.b32.xlu0 %v501, 64
        %v509 = vpop.permute.xlu0 %508
        %v511 = vmul.f32 %v500, %v509
        %513 = vrot.lane.b32.xlu0 %v511, 32
        %v514 = vpop.permute.xlu0 %513
        %v516 = vadd.f32 %v506, %v514
        %v517 = vtanh.pop %v516
        %519 = vrot.lane.b32.xlu0 %v517, 64
        %v520 = vpop.permute.xlu0 %519
        %v522 = vmul.f32 %v500, %v520
        %524 = vrot.lane.b32.xlu0 %v522, 32
        %v525 = vpop.permute.xlu0 %524
        %vm527 = vcmask 254976
        %528 = vst.msk [vmem:[#allocation2] sm:$0x3] %vm527, %v525
        %530 = vrot.lane.b32.xlu0 %v516, 96
        %v531 = vpop.permute.xlu0 %530
        %533 = vst.msk [vmem:[#allocation3] sm:$0x3] %vm527, %v531
        %s534 = scalar_lea.vmem [#allocation2], 2
        %v535 = vld [vmem:[%s534] sm:$0x3]
        %s536 = scalar_lea.vmem [#allocation3], 2
        %v537 = vld [vmem:[%s536] sm:$0x3]
        %539 = vrot.lane.b32.xlu0 %v535, 32
        %v540 = vpop.permute.xlu0 %539
        %vm542 = vcmask 261120
        %v543 = vsel %vm542, %v525, %v540
        %v544 = vpack.c.bf16 %v543, %v543
        %v545 = vld [vmem:[%s5] sm:$0xf]
        %v546 = vld [vmem:[%s5 + $0x4] sm:$0xf]
        %v547 = vld [vmem:[%s5 + $0x8] sm:$0xf]
        %v548 = vld [vmem:[%s5 + $0xc] sm:$0xf]
        %v549 = vld [vmem:[%s5 + $0x10] sm:$0xf]
        %v550 = vld [vmem:[%s5 + $0x14] sm:$0xf]
        %v551 = vld [vmem:[%s5 + $0x18] sm:$0xf]
        %v552 = vld [vmem:[%s5 + $0x1c] sm:$0xf]
        %v553 = vld [vmem:[%s6] sm:$0x1]
        %v555 = vlaneseq
        %v556 = vshrl.u32 %v555, 7
        %v557 = vsub.s32 0, %v556
        %v558 = vrot.slane %v553, %v557
        %v568 = vunpack.c.l.b16 %v545
        %v569 = vunpack.c.l.b16 %v546
        %v570 = vunpack.c.l.b16 %v547
        %v571 = vunpack.c.l.b16 %v548
        %v572 = vunpack.c.l.b16 %v549
        %v573 = vunpack.c.l.b16 %v550
        %v574 = vunpack.c.l.b16 %v551
        %v575 = vunpack.c.l.b16 %v552
        %v576 = vpack.c.b16 %v569, %v568
        %v577 = vpack.c.b16 %v571, %v570
        %v578 = vpack.c.b16 %v573, %v572
        %v579 = vpack.c.b16 %v575, %v574
        %vm584 = vcmask 523264
        %v586 = vsel %vm584, %v544, 0
        %588 = vmatprep.subr.bf16.mxu0 0
        %589 = vmatpush1.bf16.msra.mxu0 %v576
        %590 = vmatprep.subr.bf16.mxu0 0
        %591 = vmatpush1.bf16.msra.mxu0 %v577
        %592 = vmatprep.subr.bf16.mxu0 0
        %593 = vmatpush1.bf16.msra.mxu0 %v578
        %594 = vmatprep.subr.bf16.mxu0 0
        %595 = vmatpush1.bf16.msra.mxu0 %v579
        %596 = vmatprep.subr.bf16.mxu0 0
        %597 = vmatpush1.bf16.msra.mxu0 0
        %598 = vmatprep.subr.bf16.mxu0 0
        %599 = vmatpush1.bf16.msra.mxu0 0
        %600 = vmatprep.subr.bf16.mxu0 0
        %601 = vmatpush1.bf16.msra.mxu0 0
        %602 = vmatprep.subr.bf16.mxu0 0
        %603 = vmatpush1.bf16.msra.mxu0 0
        %604 = vmatprep.subr.bf16.mxu0 0
        %605 = vmatpush1.bf16.msra.mxu0 0
        %606 = vmatprep.subr.bf16.mxu0 0
        %607 = vmatpush1.bf16.msra.mxu0 0
        %608 = vmatprep.subr.bf16.mxu0 0
        %609 = vmatpush1.bf16.msra.mxu0 0
        %610 = vmatprep.subr.bf16.mxu0 0
        %611 = vmatpush1.bf16.msra.mxu0 0
        %612 = vmatprep.subr.bf16.mxu0 0
        %613 = vmatpush1.bf16.msra.mxu0 0
        %614 = vmatprep.subr.bf16.mxu0 0
        %615 = vmatpush1.bf16.msra.mxu0 0
        %616 = vmatprep.subr.bf16.mxu0 0
        %617 = vmatpush1.bf16.msra.mxu0 0
        %618 = vmatprep.subr.bf16.mxu0 0
        %619 = vmatpush1.bf16.msra.mxu0 0
        %620 = vmatprep.mubr.bf16.mxu0 0
        %621 = vmatmul.mubr.bf16.gmra.mrb[0].mxu0 %v586
        %v622 = vpop.f32.mrb[0].mxu0
        %v623 = vadd.f32 %v558, %v622
        %v624 = vpop.f32.mrb[0].mxu0
        %v625 = vpop.f32.mrb[0].mxu0
        %v626 = vpop.f32.mrb[0].mxu0
        %627 = vdwg.mxu0
        %v628 = vxor.u32 %v623, 2147483648
        %v629 = vmul.f32 %v628, 1.442695
        %v630 = vpow.pop %v629
        %v631 = vadd.f32 %v630, 1.0
        %v632 = vrcp.pop %v631
        %v633 = vmul.f32 1.0, %v632
        %v634 = vtanh.pop %v623
        %636 = vrot.lane.b32.xlu0 %v537, 32
        %v637 = vpop.permute.xlu0 %636
        %v639 = vmul.f32 %v633, %v637
        %641 = vrot.lane.b32.xlu0 %v634, 64
        %v642 = vpop.permute.xlu0 %641
        %v644 = vmul.f32 %v633, %v642
        %646 = vrot.lane.b32.xlu0 %v644, 32
        %v647 = vpop.permute.xlu0 %646
        %v649 = vadd.f32 %v639, %v647
        %v650 = vtanh.pop %v649
        %652 = vrot.lane.b32.xlu0 %v650, 64
        %v653 = vpop.permute.xlu0 %652
        %v655 = vmul.f32 %v633, %v653
        %657 = vrot.lane.b32.xlu0 %v655, 32
        %v658 = vpop.permute.xlu0 %657
        %660 = vst.msk [vmem:[%s534] sm:$0x3] %vm527, %v658
        %662 = vrot.lane.b32.xlu0 %v649, 96
        %v663 = vpop.permute.xlu0 %662
        %665 = vst.msk [vmem:[%s536] sm:$0x3] %vm527, %v663
        %p666 = scmp.eq.s32.totalorder %s27, 7
        // Predicated region
        $region69: #{lstm_decoder_forward.1} parent=55 // pred_check
          %p667 = pneg %p666
        $region70: #{lstm_decoder_forward.1} parent=55 // pred_check_branch
          %669 = sbr.rel (%p667) target = $region72
        $region71: #{lstm_decoder_forward.1} parent=55 // pred_region
          %v670 = vpack.c.bf16 %v655, %v655
          %v671 = vld [vmem:[%s7] sm:$0xf]
          %v672 = vld [vmem:[%s7 + $0x4] sm:$0xf]
          %v673 = vld [vmem:[%s7 + $0x8] sm:$0xf]
          %v674 = vld [vmem:[%s7 + $0xc] sm:$0xf]
          %v675 = vld [vmem:[%s8] sm:$0x1]
          %v677 = vlaneseq
          %v678 = vshrl.u32 %v677, 7
          %v679 = vsub.s32 0, %v678
          %v680 = vrot.slane %v675, %v679
          %683 = vrot.lane.b32.xlu0 %v670, 32
          %v684 = vpop.permute.xlu0 %683
          %v689 = vunpack.c.l.b16 %v671
          %v690 = vunpack.c.l.b16 %v672
          %v691 = vunpack.c.l.b16 %v673
          %v692 = vunpack.c.l.b16 %v674
          %v693 = vpack.c.b16 %v690, %v689
          %v694 = vpack.c.b16 %v692, %v691
          %v698 = vsel %vm542, %v684, 0
          %700 = vmatprep.subr.bf16.mxu0 0
          %701 = vmatpush1.bf16.msra.mxu0 %v693
          %702 = vmatprep.subr.bf16.mxu0 0
          %703 = vmatpush1.bf16.msra.mxu0 %v694
          %704 = vmatprep.subr.bf16.mxu0 0
          %705 = vmatpush1.bf16.msra.mxu0 0
          %706 = vmatprep.subr.bf16.mxu0 0
          %707 = vmatpush1.bf16.msra.mxu0 0
          %708 = vmatprep.subr.bf16.mxu0 0
          %709 = vmatpush1.bf16.msra.mxu0 0
          %710 = vmatprep.subr.bf16.mxu0 0
          %711 = vmatpush1.bf16.msra.mxu0 0
          %712 = vmatprep.subr.bf16.mxu0 0
          %713 = vmatpush1.bf16.msra.mxu0 0
          %714 = vmatprep.subr.bf16.mxu0 0
          %715 = vmatpush1.bf16.msra.mxu0 0
          %716 = vmatprep.subr.bf16.mxu0 0
          %717 = vmatpush1.bf16.msra.mxu0 0
          %718 = vmatprep.subr.bf16.mxu0 0
          %719 = vmatpush1.bf16.msra.mxu0 0
          %720 = vmatprep.subr.bf16.mxu0 0
          %721 = vmatpush1.bf16.msra.mxu0 0
          %722 = vmatprep.subr.bf16.mxu0 0
          %723 = vmatpush1.bf16.msra.mxu0 0
          %724 = vmatprep.subr.bf16.mxu0 0
          %725 = vmatpush1.bf16.msra.mxu0 0
          %726 = vmatprep.subr.bf16.mxu0 0
          %727 = vmatpush1.bf16.msra.mxu0 0
          %728 = vmatprep.subr.bf16.mxu0 0
          %729 = vmatpush1.bf16.msra.mxu0 0
          %730 = vmatprep.subr.bf16.mxu0 0
          %731 = vmatpush1.bf16.msra.mxu0 0
          %732 = vmatprep.mubr.bf16.mxu0 0
          %733 = vmatmul.mubr.bf16.gmra.mrb[0].mxu0 %v698
          %v734 = vpop.f32.mrb[0].mxu0
          %v735 = vadd.f32 %v680, %v734
          %v736 = vpop.f32.mrb[0].mxu0
          %v737 = vpop.f32.mrb[0].mxu0
          %v738 = vpop.f32.mrb[0].mxu0
          %739 = vdwg.mxu0
          %v740 = vmax.f32 %v735, 0.0
          %vm741 = vcmask 123904
          %742 = vst.msk [vmem:[#allocation9] sm:$0x3] %vm741, %v740
          %v743 = vld [vmem:[#allocation2] sm:$0x3]
          %v744 = vld [vmem:[#allocation2 + $0x2] sm:$0x3]
          %745 = vst.msk [vmem:[#allocation10] sm:$0x3] %vm527, %v743
          %746 = vst.msk [vmem:[#allocation10 + $0x2] sm:$0x3] %vm527, %v744
          %v747 = vld [vmem:[#allocation3] sm:$0x3]
          %v748 = vld [vmem:[#allocation3 + $0x2] sm:$0x3]
          %749 = vst.msk [vmem:[#allocation12] sm:$0x3] %vm527, %v747
          %750 = vst.msk [vmem:[#allocation12 + $0x2] sm:$0x3] %vm527, %v748
        $region72: #{lstm_decoder_forward.1} parent=55 // pred_fallthru
          _
        // Predicated region
        $region73: #{lstm_decoder_forward.1} parent=55 // pred_check
          %p751 = pneg %p234
        $region74: #{lstm_decoder_forward.1} parent=55 // pred_check_branch
          %753 = sbr.rel (%p751) target = $region76
        $region75: #{lstm_decoder_forward.1} parent=55 // pred_region
          %s755 = ssub.s32 32, 32
          %756 = vsyncadd [#allocation6], %s755
          %s758 = sshll.u32 [#allocation9], 4
          %s759 = int_to_ptr.vmem [resolvable:$true] %s758
          %761 = dma.vmem_to_hbm [thread:$0]  %s759, 32, %s9, [#allocation6]
        $region76: #{lstm_decoder_forward.1} parent=55 // pred_fallthru
          _
        // Predicated region
        $region77: #{lstm_decoder_forward.1} parent=55 // pred_check
          %p762 = pneg %p255
        $region78: #{lstm_decoder_forward.1} parent=55 // pred_check_branch
          %764 = sbr.rel (%p762) target = $region80
        $region79: #{lstm_decoder_forward.1} parent=55 // pred_region
          %s766 = ssub.s32 64, 64
          %767 = vsyncadd [#allocation11], %s766
          %s768 = sshll.u32 [#allocation10], 4
          %s769 = int_to_ptr.vmem [resolvable:$true] %s768
          %774 = dma.vmem_to_hbm [thread:$0]  %s769, 64, %s10, [#allocation11], 32, 32, 2
        $region80: #{lstm_decoder_forward.1} parent=55 // pred_fallthru
          _
        // Predicated region
        $region81: #{lstm_decoder_forward.1} parent=55 // pred_check
          %p775 = pneg %p276
        $region82: #{lstm_decoder_forward.1} parent=55 // pred_check_branch
          %777 = sbr.rel (%p775) target = $region84
        $region83: #{lstm_decoder_forward.1} parent=55 // pred_region
          %s779 = ssub.s32 64, 64
          %780 = vsyncadd [#allocation11], %s779
          %s781 = sshll.u32 [#allocation12], 4
          %s782 = int_to_ptr.vmem [resolvable:$true] %s781
          %787 = dma.vmem_to_hbm [thread:$0]  %s782, 64, %s11, [#allocation11], 32, 32, 2
        $region84: #{lstm_decoder_forward.1} parent=55 // pred_fallthru
          _
        // Predicated region
        $region85: #{lstm_decoder_forward.1} parent=55 // pred_check
          %p788 = pneg %p234
        $region86: #{lstm_decoder_forward.1} parent=55 // pred_check_branch
          %790 = sbr.rel (%p788) target = $region88
        $region87: #{lstm_decoder_forward.1} parent=55 // pred_region
          %791 = dma.done [#allocation6], 32
        $region88: #{lstm_decoder_forward.1} parent=55 // pred_fallthru
          _
        // Predicated region
        $region89: #{lstm_decoder_forward.1} parent=55 // pred_check
          %p792 = pneg %p255
        $region90: #{lstm_decoder_forward.1} parent=55 // pred_check_branch
          %794 = sbr.rel (%p792) target = $region92
        $region91: #{lstm_decoder_forward.1} parent=55 // pred_region
          %795 = dma.done [#allocation11], 64
        $region92: #{lstm_decoder_forward.1} parent=55 // pred_fallthru
          _
        // Predicated region
        $region93: #{lstm_decoder_forward.1} parent=55 // pred_check
          %p796 = pneg %p276
        $region94: #{lstm_decoder_forward.1} parent=55 // pred_check_branch
          %798 = sbr.rel (%p796) target = $region96
        $region95: #{lstm_decoder_forward.1} parent=55 // pred_region
          %799 = dma.done [#allocation11], 64
        $region96: #{lstm_decoder_forward.1} parent=55 // pred_fallthru
          _
      $region56: #{lstm_decoder_forward.1} parent=5 // pred_fallthru
        _
      %p800 = scmp.le.s32.totalorder 2, %s22
      // Predicated region
      $region97: #{lstm_decoder_forward.1} parent=5 // pred_check
        %p801 = pneg %p800
      $region98: #{lstm_decoder_forward.1} parent=5 // pred_check_branch
        %803 = sbr.rel (%p801) target = $region100
      $region99: #{lstm_decoder_forward.1} parent=5 // pred_region
        %s804 = ssub.s32 %s22, 2
      $region100: #{lstm_decoder_forward.1} parent=5 // pred_fallthru
        _
    $region6: #{lstm_decoder_forward.1} parent=1 // loop_footer
      %s26 = sadd.s32 1, %s22
    $region7: #{lstm_decoder_forward.1} parent=1 // loop_footer_branch
      %21 = sbr.rel target = $region3
    $region8: #{lstm_decoder_forward.1} parent=1 // loop_exit
      _
    %805 = vsyncpa [#allocation5], 1
    %s806 = scalar_lea.sflag [#allocation5], 1
    %807 = vsyncpa %s806, 1
    %808 = vsyncpa [#allocation8], 1
    %809 = vsyncpa [#allocation6], 1
    %s810 = scalar_lea.sflag [#allocation6], 1
    %811 = vsyncpa %s810, 1
    %812 = vsyncpa [#allocation11], 1

</llo_original>
